<compile_context>
chip_gen: v6e
topology: v6e:2x2x1
jax: 0.10.0
libtpu: 0.0.40
codegen_flags: <defaults>
</compile_context>

<pallas_src>
import numpy as np
import jax
import jax.numpy as jnp
from jax.experimental import pallas as pl
from jax.experimental.pallas import tpu as pltpu


def _fused_heads_kernel(x_ref, w_ref, b_ref, out_ref):
    # x_ref:   (B_TILE, D)       bf16  -- fused user embeddings for this tile
    # w_ref:   (D, V_TILE)       bf16  -- fused (all-heads) weight, (in, out)
    # b_ref:   (1, V_TILE)       f32   -- fused bias
    # out_ref: (B_TILE, V_TILE)  f32
    out_ref[...] = (
        jnp.dot(x_ref[...], w_ref[...], preferred_element_type=jnp.float32)
        + b_ref[...]
    )


def _choose_tile(total, requested, unit=128, min_steps=1):
    """Largest multiple-of-`unit` divisor of `total` that is <= requested,
    optionally shrunk so the axis has at least `min_steps` grid steps."""
    t = max(unit, (min(requested, total) // unit) * unit)
    while total % t:
        t -= unit
    if min_steps > 1 and total // t < min_steps and total >= min_steps * unit:
        t = max(unit, ((total // min_steps) // unit) * unit)
        while total % t:
            t -= unit
    return t


# Host-side packing cache: keyed on the attr tuple + identity of the parameter
# dicts, so repeated forward calls with the same parameters reuse the packed
# (and already device-resident) tensors instead of re-packing every call.
_PACK_CACHE = {}


def pack_prediction_heads(head_weights, head_biases, attrs):
    """Concatenate per-attribute nn.Linear params into one MXU-friendly matmul.

    head_weights[a]: (V_a, D)  (PyTorch nn.Linear layout: out x in)
    head_biases[a]:  (V_a,)

    Returns:
      w_fused:  (D, V_pad) bf16  -- pre-transposed, all heads concatenated,
                                    zero-padded to a multiple of 128 lanes
      b_fused:  (1, V_pad) f32
      offsets:  per-attribute start column in the fused output
      out_dims: per-attribute V_a (for slicing the fused output)
    """
    key = (tuple(attrs), id(head_weights), id(head_biases))
    cached = _PACK_CACHE.get(key)
    if cached is not None:
        return cached

    out_dims = [int(np.shape(head_weights[a])[0]) for a in attrs]
    d = int(np.shape(head_weights[attrs[0]])[1])
    v_total = sum(out_dims)
    v_pad = max(128, -(-v_total // 128) * 128)   # multiple of 128 lanes

    w_np = np.zeros((d, v_pad), np.float32)
    b_np = np.zeros((1, v_pad), np.float32)
    offsets = []
    off = 0
    for a, v in zip(attrs, out_dims):
        w_np[:, off:off + v] = np.asarray(head_weights[a], np.float32).T
        b_np[0, off:off + v] = np.asarray(head_biases[a], np.float32)
        offsets.append(off)
        off += v

    w_fused = jax.device_put(w_np.astype(np.float32)).astype(jnp.bfloat16)
    b_fused = jax.device_put(b_np)
    result = (w_fused, b_fused, tuple(offsets), tuple(out_dims))
    _PACK_CACHE[key] = result
    return result


def masked_attribute_predictions(fused_embeddings, head_weights, head_biases,
                                 masked_attrs, *, b_tile=512, v_tile=2048):
    """Apply every masked attribute's prediction head to the fused embeddings.

    Mirrors MaskedAttributePredictionModel.forward's prediction loop:
    attrs without a head are skipped; returns {attr: (B, V_attr) logits}.
    """
    attrs = tuple(a for a in masked_attrs if a in head_weights)
    if not attrs:
        return {}

    w_fused, b_fused, offsets, out_dims = pack_prediction_heads(
        head_weights, head_biases, attrs)
    d, v_pad = w_fused.shape

    x = jnp.asarray(fused_embeddings, jnp.bfloat16)
    b, _ = x.shape

    # Pad the user batch to a multiple of 128 rows, then choose tile sizes.
    b_pad = -(-b // 128) * 128
    if b_pad != b:
        x = jnp.pad(x, ((0, b_pad - b), (0, 0)))
    bt = _choose_tile(b_pad, b_tile, min_steps=2)   # >=2 steps -> both v7x TCs
    vt = _choose_tile(v_pad, v_tile, min_steps=1)

    cost = pl.CostEstimate(
        flops=2 * b_pad * d * v_pad,
        transcendentals=0,
        bytes_accessed=(2 * b_pad * d          # x  (bf16)
                        + 2 * d * v_pad        # W  (bf16)
                        + 4 * v_pad            # bias (f32)
                        + 4 * b_pad * v_pad),  # out (f32)
    )

    out = pl.pallas_call(
        _fused_heads_kernel,
        out_shape=jax.ShapeDtypeStruct((b_pad, v_pad), jnp.float32),
        grid=(b_pad // bt, v_pad // vt),
        in_specs=[
            # fused embeddings: streamed along the batch axis only
            pl.BlockSpec((bt, d), lambda bi, vi: (bi, 0)),
            # fused weight / bias: indexed by vocab tile only
            pl.BlockSpec((d, vt), lambda bi, vi: (0, vi)),
            pl.BlockSpec((1, vt), lambda bi, vi: (0, vi)),
        ],
        out_specs=pl.BlockSpec((bt, vt), lambda bi, vi: (bi, vi)),
        compiler_params=pltpu.CompilerParams(
            dimension_semantics=("parallel", "parallel")),
        cost_estimate=cost,
    )(x, w_fused, b_fused)

    # Un-pad: drop padded users and slice each attribute's logits out of the
    # fused output columns.
    return {a: out[:b, off:off + v]
            for a, off, v in zip(attrs, offsets, out_dims)}


if __name__ == "__main__":
    FINAL_USER_EMBEDDING_DIM = 64
    B = 256  # batch of users -> 2 parallel batch tiles of 128

    attribute_info = {
        "gender": {"type": "categorical", "vocab_size": 2},
        "age_group": {"type": "categorical", "vocab_size": 8},
        "income": {"type": "numerical"},
    }
    # Last entry has no prediction head -> must be skipped, like the module does.
    masked_attrs = ["gender", "age_group", "income", "not_a_head"]

    key = jax.random.PRNGKey(0)
    keys = jax.random.split(key, 1 + 2 * len(attribute_info))

    # Stand-in for user_fusion_model output (opaque submodule in the spec).
    fused_embeddings = jax.random.normal(
        keys[0], (B, FINAL_USER_EMBEDDING_DIM), dtype=jnp.float32)

    head_weights, head_biases = {}, {}
    for i, (name, info) in enumerate(attribute_info.items()):
        out_dim = info["vocab_size"] if info["type"] == "categorical" else 1
        kw, kb = keys[1 + 2 * i], keys[2 + 2 * i]
        scale = (6.0 / (out_dim + FINAL_USER_EMBEDDING_DIM)) ** 0.5  # xavier-uniform-like
        head_weights[name] = jax.random.uniform(
            kw, (out_dim, FINAL_USER_EMBEDDING_DIM), jnp.float32, -scale, scale)
        head_biases[name] = jax.random.normal(kb, (out_dim,), jnp.float32) * 0.01

    preds = masked_attribute_predictions(
        fused_embeddings, head_weights, head_biases, masked_attrs)
    preds = jax.block_until_ready(preds)

    # References:
    #   * bf16-consistent reference (same input rounding, f32 accumulation)
    #     for a tight numerical check of the kernel itself;
    #   * pure-f32 reference as a loose sanity bound on the bf16 cast error.
    x_bf16 = fused_embeddings.astype(jnp.bfloat16)
    for name in attribute_info:
        w = head_weights[name]
        bvec = head_biases[name]
        ref_bf16 = jnp.dot(x_bf16, w.T.astype(jnp.bfloat16),
                           preferred_element_type=jnp.float32) + bvec
        ref_f32 = fused_embeddings @ w.T + bvec
        assert preds[name].shape == ref_f32.shape, (name, preds[name].shape)
        assert jnp.allclose(preds[name], ref_bf16, atol=2e-3, rtol=2e-3), name
        assert jnp.allclose(preds[name], ref_f32, atol=5e-2, rtol=5e-2), name
    assert "not_a_head" not in preds

    # Second call exercises the packing cache (no host-side re-pack).
    preds2 = masked_attribute_predictions(
        fused_embeddings, head_weights, head_biases, masked_attrs)
    jax.block_until_ready(preds2)

    print("KERNEL_OK")
</pallas_src>

<mosaic_0001>
module attributes {stable_mosaic.version = 11 : i64} {
  func.func @_fused_heads_kernel(%arg0: i32, %arg1: i32, %arg2: memref<128x64xbf16, #tpu.memory_space<vmem>>, %arg3: memref<64x128xbf16, #tpu.memory_space<vmem>>, %arg4: memref<1x128xf32, #tpu.memory_space<vmem>>, %arg5: memref<128x128xf32, #tpu.memory_space<vmem>>) attributes {dimension_semantics = [#tpu.dimension_semantics<parallel>, #tpu.dimension_semantics<parallel>], iteration_bounds = array<i64: 2, 1>, scalar_prefetch = 0 : i64, scratch_operands = 0 : i64, tpu.core_type = #tpu.core_type<tc>, window_params = [{transform_indices = @transform_0, window_bounds = array<i64: 128, 64>}, {transform_indices = @transform_1, window_bounds = array<i64: 64, 128>}, {transform_indices = @transform_2, window_bounds = array<i64: 1, 128>}, {transform_indices = @transform_3, window_bounds = array<i64: 128, 128>}]} {
    %c0 = arith.constant 0 : index
    %c0_0 = arith.constant 0 : index
    %0 = vector.load %arg2[%c0, %c0_0] : memref<128x64xbf16, #tpu.memory_space<vmem>>, vector<128x64xbf16>
    %c0_1 = arith.constant 0 : index
    %c0_2 = arith.constant 0 : index
    %1 = vector.load %arg3[%c0_1, %c0_2] : memref<64x128xbf16, #tpu.memory_space<vmem>>, vector<64x128xbf16>
    %cst = arith.constant dense<0.000000e+00> : vector<128x128xf32>
    %2 = tpu.matmul %0, %1, %cst {dimension_numbers = #tpu.dot_dimension_numbers<[1], [0], [0], [1], [0, 0, 1, 1], [], []>} : vector<128x64xbf16>, vector<64x128xbf16>, vector<128x128xf32> -> vector<128x128xf32>
    %c0_3 = arith.constant 0 : index
    %c0_4 = arith.constant 0 : index
    %3 = vector.load %arg4[%c0_3, %c0_4] : memref<1x128xf32, #tpu.memory_space<vmem>>, vector<1x128xf32>
    %4 = vector.broadcast %3 : vector<1x128xf32> to vector<128x128xf32>
    %5 = arith.addf %2, %4 : vector<128x128xf32>
    %c0_5 = arith.constant 0 : index
    %c0_6 = arith.constant 0 : index
    %6 = vector.load %arg5[%c0_5, %c0_6] : memref<128x128xf32, #tpu.memory_space<vmem>>, vector<128x128xf32>
    tpu.vector_store %arg5[%c0_5, %c0_6], %5 {strides = array<i32>} : memref<128x128xf32, #tpu.memory_space<vmem>>, vector<128x128xf32>,
    return
  }
  func.func @transform_0(%arg0: i32, %arg1: i32) -> (i32, i32) {
    %c0_i32 = arith.constant 0 : i32
    %c0_i32_0 = arith.constant 0 : i32
    return %arg0, %c0_i32 : i32, i32
  }
  func.func @transform_1(%arg0: i32, %arg1: i32) -> (i32, i32) {
    %c0_i32 = arith.constant 0 : i32
    %c0_i32_0 = arith.constant 0 : i32
    return %c0_i32, %arg1 : i32, i32
  }
  func.func @transform_2(%arg0: i32, %arg1: i32) -> (i32, i32) {
    %c0_i32 = arith.constant 0 : i32
    %c0_i32_0 = arith.constant 0 : i32
    return %c0_i32, %arg1 : i32, i32
  }
  func.func @transform_3(%arg0: i32, %arg1: i32) -> (i32, i32) {
    %c0_i32 = arith.constant 0 : i32
    return %arg0, %arg1 : i32, i32
  }
}

</mosaic_0001>

<llo_original>
// kernel: tpu_custom_call.1
$region0: #{tpu_custom_call.1}
  #allocation0 [shape = 'u32[]', space=smem, size = 0x4, offset = 0x4, fixed_abs, tag = 'smem constant byte address 0x4 - core index']
  #allocation1 [shape = 'u32[144,128]{1,0:T(1,128)}', space=vmem, size = 0x12000, scoped, tag = 'internal scratch']
  %s0 = inlined_call_operand.vmem [shape: bf16[256,64], index: 0, kind: input, shape index: {}]
  %s1 = inlined_call_operand.vmem [shape: bf16[64,128], index: 1, kind: input, shape index: {}]
  %s2 = inlined_call_operand.vmem [shape: f32[1,128], index: 2, kind: input, shape index: {}]
  %s3 = inlined_call_operand.hbm [shape: f32[256,128], index: 3, kind: output, shape index: {}]
  %s4 = sld [smem:[#allocation0]]
  $region45: #{tpu_custom_call.1} parent=0
    _
  %s6 = ssub.s32 1, %s4
  %s7 = scalar_select 0, %s6, %s4
  $region1: #{tpu_custom_call.1} parent=0
    #allocation2 [shape = 'u8[131072]{0}', space=vmem, size = 0x20000, scoped, tag = 'output window, operand 0']
    #allocation3 [shape = 's32[2]{0}', space=sflag, size = 0x8, scoped, tag = 'scoped memory for tpu_custom_call.1']
    %8 = vsyncpa [#allocation3], 0
    %s9 = scalar_lea.sflag [#allocation3], 1
    %10 = vsyncpa %s9, 0
    loop: start=0, step=1, limit=4
    $region2: #{tpu_custom_call.1} parent=1 // loop_pre_header
      _
    $region3: #{tpu_custom_call.1} parent=1 // loop_header
      %s12 = sphi 0, %s16
      %p13 = scmp.ge.s32.totalorder %s12, 4
      %s19 = sphi 0, %s31
      %s20 = sphi 0, %s27
      %s21 = sphi 0, %s19
      %s22 = sphi 0, %s20
      %s23 = sphi 0, %s21
      %s24 = sphi 0, %s22
      %s34 = sphi 0, %s36
      %s37 = sphi 0, %s34
      %s38 = sphi 0, %s37
      %s54 = sphi 0, %s38
      %s60 = sphi 0, %s62
      %s63 = sphi 0, %s60
      %s64 = sphi 0, %s63
      %s80 = sphi 0, %s64
      %s86 = sphi 0, %s88
      %s89 = sphi 0, %s86
      %s90 = sphi 0, %s89
      %s106 = sphi 0, %s90
      %s114 = sphi 0, %s116
      %s117 = sphi 0, %s114
      %s118 = sphi 0, %s117
      %s134 = sphi 0, %s118
    $region4: #{tpu_custom_call.1} parent=1 // loop_header_branch
      %15 = sbr.rel (%p13) target = $region8
    $region5: #{tpu_custom_call.1} parent=1 // loop_body
      %s17 = ssub.s32 %s12, 1
      %s18 = ssub.s32 %s12, 2
      %s25 = sadd.s32 1, %s20
      %p26 = scmp.ge.s32.totalorder %s25, 1
      %s27 = scalar_select %p26, 0, %s25
      %s28 = sadd.s32 1, %s19
      %s29 = scalar_select %p26, %s28, %s19
      %p30 = scmp.ge.s32.totalorder %s29, 2
      %s31 = scalar_select %p30, 0, %s29
      %s32 = ssub.s32 %s19, %s31
      %p33 = scmp.eq.s32.totalorder %s32, 0
      %s35 = sadd.s32 %s34, 1
      %s36 = scalar_select %p33, %s34, %s35
      %p39 = pneg %p33
      %p40 = scmp.eq.s32.totalorder %s12, 1
      %p41 = por %p39, %p40
      %p42 = scmp.ne.s32.totalorder %s34, %s37
      %p43 = scmp.eq.s32.totalorder %s12, 0
      %p44 = por %p42, %p43
      %p45 = scmp.ne.s32.totalorder %s34, %s37
      %p46 = scmp.eq.s32.totalorder %s17, 1
      %p47 = por %p45, %p46
      %p48 = scmp.ne.s32.totalorder %s37, %s38
      %p49 = scmp.eq.s32.totalorder %s17, 0
      %p50 = por %p48, %p49
      %p51 = scmp.ne.s32.totalorder %s37, %s38
      %p52 = scmp.eq.s32.totalorder %s18, 1
      %p53 = por %p51, %p52
      %p55 = scmp.ne.s32.totalorder %s38, %s54
      %p56 = scmp.eq.s32.totalorder %s18, 0
      %p57 = por %p55, %p56
      %s58 = ssub.s32 %s20, %s27
      %p59 = scmp.eq.s32.totalorder %s58, 0
      %s61 = sadd.s32 %s60, 1
      %s62 = scalar_select %p59, %s60, %s61
      %p65 = pneg %p59
      %p66 = scmp.eq.s32.totalorder %s12, 1
      %p67 = por %p65, %p66
      %p68 = scmp.ne.s32.totalorder %s60, %s63
      %p69 = scmp.eq.s32.totalorder %s12, 0
      %p70 = por %p68, %p69
      %p71 = scmp.ne.s32.totalorder %s60, %s63
      %p72 = scmp.eq.s32.totalorder %s17, 1
      %p73 = por %p71, %p72
      %p74 = scmp.ne.s32.totalorder %s63, %s64
      %p75 = scmp.eq.s32.totalorder %s17, 0
      %p76 = por %p74, %p75
      %p77 = scmp.ne.s32.totalorder %s63, %s64
      %p78 = scmp.eq.s32.totalorder %s18, 1
      %p79 = por %p77, %p78
      %p81 = scmp.ne.s32.totalorder %s64, %s80
      %p82 = scmp.eq.s32.totalorder %s18, 0
      %p83 = por %p81, %p82
      %s84 = ssub.s32 %s20, %s27
      %p85 = scmp.eq.s32.totalorder %s84, 0
      %s87 = sadd.s32 %s86, 1
      %s88 = scalar_select %p85, %s86, %s87
      %p91 = pneg %p85
      %p92 = scmp.eq.s32.totalorder %s12, 1
      %p93 = por %p91, %p92
      %p94 = scmp.ne.s32.totalorder %s86, %s89
      %p95 = scmp.eq.s32.totalorder %s12, 0
      %p96 = por %p94, %p95
      %p97 = scmp.ne.s32.totalorder %s86, %s89
      %p98 = scmp.eq.s32.totalorder %s17, 1
      %p99 = por %p97, %p98
      %p100 = scmp.ne.s32.totalorder %s89, %s90
      %p101 = scmp.eq.s32.totalorder %s17, 0
      %p102 = por %p100, %p101
      %p103 = scmp.ne.s32.totalorder %s89, %s90
      %p104 = scmp.eq.s32.totalorder %s18, 1
      %p105 = por %p103, %p104
      %p107 = scmp.ne.s32.totalorder %s90, %s106
      %p108 = scmp.eq.s32.totalorder %s18, 0
      %p109 = por %p107, %p108
      %s110 = ssub.s32 %s19, %s31
      %s111 = ssub.s32 %s20, %s27
      %s112 = sor.u32 %s110, %s111
      %p113 = scmp.eq.s32.totalorder %s112, 0
      %s115 = sadd.s32 %s114, 1
      %s116 = scalar_select %p113, %s114, %s115
      %p119 = pneg %p113
      %p120 = scmp.eq.s32.totalorder %s12, 1
      %p121 = por %p119, %p120
      %p122 = scmp.ne.s32.totalorder %s114, %s117
      %p123 = scmp.eq.s32.totalorder %s12, 0
      %p124 = por %p122, %p123
      %p125 = scmp.ne.s32.totalorder %s114, %s117
      %p126 = scmp.eq.s32.totalorder %s17, 1
      %p127 = por %p125, %p126
      %p128 = scmp.ne.s32.totalorder %s117, %s118
      %p129 = scmp.eq.s32.totalorder %s17, 0
      %p130 = por %p128, %p129
      %p131 = scmp.ne.s32.totalorder %s117, %s118
      %p132 = scmp.eq.s32.totalorder %s18, 1
      %p133 = por %p131, %p132
      %p135 = scmp.ne.s32.totalorder %s118, %s134
      %p136 = scmp.eq.s32.totalorder %s18, 0
      %p137 = por %p135, %p136
      %p138 = scmp.le.s32.totalorder 1, %s12
      %p139 = scmp.lt.s32.totalorder %s12, 3
      %p140 = pnand %p138, %p139
      %p141 = pneg %p140
      // Predicated region
      $region9: #{tpu_custom_call.1} parent=5 // pred_check
        _
      $region10: #{tpu_custom_call.1} parent=5 // pred_check_branch
        %143 = sbr.rel (%p140) target = $region12
      $region11: #{tpu_custom_call.1} parent=5 // pred_region
        %s144 = ssub.s32 %s12, 1
        // Predicated region
        $region13: #{tpu_custom_call.1} parent=11 // pred_check
          %p145 = pneg %p76
        $region14: #{tpu_custom_call.1} parent=11 // pred_check_branch
          %147 = sbr.rel (%p145) target = $region16
        $region15: #{tpu_custom_call.1} parent=11 // pred_region
          %p148 = scmp.lt.s32.totalorder %s22, 0
          %s149 = scalar_select %p148, %s22, 0
          %s150 = smul.addr %s149, 4
          %s151 = scalar_lea.vmem %s1, %s150
        $region16: #{tpu_custom_call.1} parent=11 // pred_fallthru
          _
        // Predicated region
        $region17: #{tpu_custom_call.1} parent=11 // pred_check
          %p152 = pneg %p102
        $region18: #{tpu_custom_call.1} parent=11 // pred_check_branch
          %154 = sbr.rel (%p152) target = $region20
        $region19: #{tpu_custom_call.1} parent=11 // pred_region
          %p155 = scmp.lt.s32.totalorder %s22, 0
          %s156 = scalar_select %p155, %s22, 0
          %s157 = scalar_lea.vmem %s2, %s156
        $region20: #{tpu_custom_call.1} parent=11 // pred_fallthru
          _
      $region12: #{tpu_custom_call.1} parent=5 // pred_fallthru
        _
      %p158 = scmp.lt.s32.totalorder %s12, 2
      // Predicated region
      $region21: #{tpu_custom_call.1} parent=5 // pred_check
        %p159 = pneg %p158
      $region22: #{tpu_custom_call.1} parent=5 // pred_check_branch
        %161 = sbr.rel (%p159) target = $region24
      $region23: #{tpu_custom_call.1} parent=5 // pred_region
        // Predicated region
        $region25: #{tpu_custom_call.1} parent=23 // pred_check
          %p162 = pneg %p44
        $region26: #{tpu_custom_call.1} parent=23 // pred_check_branch
          %164 = sbr.rel (%p162) target = $region28
        $region27: #{tpu_custom_call.1} parent=23 // pred_region
          %s165 = smul.u32 16, %s19
          %p166 = scmp.lt.s32.totalorder %s165, 31
          %s167 = scalar_select %p166, %s165, 31
          %s168 = smul.addr %s167, 4
          %s169 = scalar_lea.vmem %s0, %s168
          %s170 = smul.u32 16, %s19
        $region28: #{tpu_custom_call.1} parent=23 // pred_fallthru
          _
      $region24: #{tpu_custom_call.1} parent=5 // pred_fallthru
        _
      %p171 = scmp.le.s32.totalorder 1, %s12
      %p172 = scmp.lt.s32.totalorder %s12, 3
      %p173 = pnand %p171, %p172
      %p174 = pneg %p173
      // Predicated region
      $region29: #{tpu_custom_call.1} parent=5 // pred_check
        _
      $region30: #{tpu_custom_call.1} parent=5 // pred_check_branch
        %176 = sbr.rel (%p173) target = $region32
      $region31: #{tpu_custom_call.1} parent=5 // pred_region
        %s177 = ssub.s32 %s12, 1
        %s178 = smul.u32 16, %s21
        %p179 = scmp.lt.s32.totalorder %s178, 31
        %s180 = scalar_select %p179, %s178, 31
        %s181 = smul.addr %s180, 4
        %s182 = scalar_lea.vmem %s0, %s181
        %p183 = pneg %p50
        %p184 = pneg %p47
        %p185 = scmp.lt.s32.totalorder %s22, 0
        %s186 = scalar_select %p185, %s22, 0
        %s187 = smul.addr %s186, 4
        %s188 = scalar_lea.vmem %s1, %s187
        %p189 = pneg %p76
        %p190 = pneg %p73
        %p191 = scmp.lt.s32.totalorder %s22, 0
        %s192 = scalar_select %p191, %s22, 0
        %s193 = scalar_lea.vmem %s2, %s192
        %p194 = pneg %p102
        %p195 = pneg %p99
        %p196 = pneg %p130
        %p197 = pneg %p127
        %s198 = sand.u32 %s117, 1
        %s199 = scalar_lea.sflag [#allocation3], %s198
        %s200 = sand.u32 %s117, 1
        %s201 = smul.addr %s200, 128
        %s202 = scalar_lea.vmem [#allocation2], %s201
        %s203 = smul.u32 16, %s21
        %p204 = scmp.lt.s32.totalorder %s203, 31
        %s205 = scalar_select %p204, %s203, 31
        %s206 = smul.addr %s205, 4
        %s207 = scalar_lea.vmem %s0, %s206
        %s208 = smul.u32 16, %s21
        %p209 = scmp.lt.s32.totalorder %s22, 0
        %s210 = scalar_select %p209, %s22, 0
        %s211 = smul.addr %s210, 4
        %s212 = scalar_lea.vmem %s1, %s211
        %p213 = scmp.lt.s32.totalorder %s22, 0
        %s214 = scalar_select %p213, %s22, 0
        %s215 = scalar_lea.vmem %s2, %s214
        %s216 = smul.u32 16, %s21
        %v218 = vld [vmem:[%s207] sm:$0xf]
        %v219 = vld [vmem:[%s207 + $0x4] sm:$0xf]
        %v220 = vld [vmem:[%s207 + $0x8] sm:$0xf]
        %v221 = vld [vmem:[%s207 + $0xc] sm:$0xf]
        %v222 = vld [vmem:[%s207 + $0x10] sm:$0xf]
        %v223 = vld [vmem:[%s207 + $0x14] sm:$0xf]
        %v224 = vld [vmem:[%s207 + $0x18] sm:$0xf]
        %v225 = vld [vmem:[%s207 + $0x1c] sm:$0xf]
        %v226 = vld [vmem:[%s207 + $0x20] sm:$0xf]
        %v227 = vld [vmem:[%s207 + $0x24] sm:$0xf]
        %v228 = vld [vmem:[%s207 + $0x28] sm:$0xf]
        %v229 = vld [vmem:[%s207 + $0x2c] sm:$0xf]
        %v230 = vld [vmem:[%s207 + $0x30] sm:$0xf]
        %v231 = vld [vmem:[%s207 + $0x34] sm:$0xf]
        %v232 = vld [vmem:[%s207 + $0x38] sm:$0xf]
        %v233 = vld [vmem:[%s207 + $0x3c] sm:$0xf]
        %v234 = vld [vmem:[%s212] sm:$0xf]
        %v235 = vld [vmem:[%s212 + $0x4] sm:$0xf]
        %v236 = vld [vmem:[%s212 + $0x8] sm:$0xf]
        %v237 = vld [vmem:[%s212 + $0xc] sm:$0xf]
        %v238 = vld [vmem:[%s212 + $0x10] sm:$0xf]
        %v239 = vld [vmem:[%s212 + $0x14] sm:$0xf]
        %v240 = vld [vmem:[%s212 + $0x18] sm:$0xf]
        %v241 = vld [vmem:[%s212 + $0x1c] sm:$0xf]
        %v242 = vld [vmem:[%s215] sm:$0x1]
        %v244 = vlaneseq
        %v245 = vshrl.u32 %v244, 7
        %v246 = vsub.s32 0, %v245
        %v247 = vrot.slane %v242, %v246
        %v265 = vunpack.c.l.b16 %v218
        %v266 = vunpack.c.l.b16 %v219
        %v267 = vunpack.c.l.b16 %v220
        %v268 = vunpack.c.l.b16 %v221
        %v269 = vunpack.c.l.b16 %v222
        %v270 = vunpack.c.l.b16 %v223
        %v271 = vunpack.c.l.b16 %v224
        %v272 = vunpack.c.l.b16 %v225
        %v273 = vunpack.c.l.b16 %v226
        %v274 = vunpack.c.l.b16 %v227
        %v275 = vunpack.c.l.b16 %v228
        %v276 = vunpack.c.l.b16 %v229
        %v277 = vunpack.c.l.b16 %v230
        %v278 = vunpack.c.l.b16 %v231
        %v279 = vunpack.c.l.b16 %v232
        %v280 = vunpack.c.l.b16 %v233
        %v281 = vpack.c.b16 %v266, %v265
        %v282 = vpack.c.b16 %v268, %v267
        %v283 = vpack.c.b16 %v270, %v269
        %v284 = vpack.c.b16 %v272, %v271
        %v285 = vpack.c.b16 %v274, %v273
        %v286 = vpack.c.b16 %v276, %v275
        %v287 = vpack.c.b16 %v278, %v277
        %v288 = vpack.c.b16 %v280, %v279
        %v297 = vunpack.c.l.b16 %v234
        %v298 = vunpack.c.l.b16 %v235
        %v299 = vunpack.c.l.b16 %v236
        %v300 = vunpack.c.l.b16 %v237
        %v301 = vunpack.c.l.b16 %v238
        %v302 = vunpack.c.l.b16 %v239
        %v303 = vunpack.c.l.b16 %v240
        %v304 = vunpack.c.l.b16 %v241
        %v305 = vpack.c.b16 %v298, %v297
        %v306 = vpack.c.b16 %v300, %v299
        %v307 = vpack.c.b16 %v302, %v301
        %v308 = vpack.c.b16 %v304, %v303
        %vm313 = vcmask 523264
        %v315 = vsel %vm313, %v281, 0
        %v318 = vsel %vm313, %v282, 0
        %v321 = vsel %vm313, %v283, 0
        %v324 = vsel %vm313, %v284, 0
        %v327 = vsel %vm313, %v285, 0
        %v330 = vsel %vm313, %v286, 0
        %v333 = vsel %vm313, %v287, 0
        %v336 = vsel %vm313, %v288, 0
        %338 = vmatprep.subr.bf16.mxu0 0
        %339 = vmatpush1.bf16.msra.mxu0 0
        %340 = vmatprep.subr.bf16.mxu0 0
        %341 = vmatpush1.bf16.msra.mxu0 0
        %342 = vmatprep.subr.bf16.mxu0 0
        %343 = vmatpush1.bf16.msra.mxu0 0
        %344 = vmatprep.subr.bf16.mxu0 0
        %345 = vmatpush1.bf16.msra.mxu0 0
        %346 = vmatprep.subr.bf16.mxu0 0
        %347 = vmatpush1.bf16.msra.mxu0 %v308
        %348 = vmatprep.subr.bf16.mxu0 0
        %349 = vmatpush1.bf16.msra.mxu0 %v307
        %350 = vmatprep.subr.bf16.mxu0 0
        %351 = vmatpush1.bf16.msra.mxu0 %v306
        %352 = vmatprep.subr.bf16.mxu0 0
        %353 = vmatpush1.bf16.msra.mxu0 %v305
        %354 = vmatprep.subr.bf16.mxu0 0
        %355 = vmatpush2.bf16.msra.mxu0 0
        %356 = vmatprep.subr.bf16.mxu0 0
        %357 = vmatpush2.bf16.msra.mxu0 0
        %358 = vmatprep.subr.bf16.mxu0 0
        %359 = vmatpush2.bf16.msra.mxu0 0
        %360 = vmatprep.subr.bf16.mxu0 0
        %361 = vmatpush2.bf16.msra.mxu0 0
        %362 = vmatprep.subr.bf16.mxu0 0
        %363 = vmatpush2.bf16.msra.mxu0 0
        %364 = vmatprep.subr.bf16.mxu0 0
        %365 = vmatpush2.bf16.msra.mxu0 0
        %366 = vmatprep.subr.bf16.mxu0 0
        %367 = vmatpush2.bf16.msra.mxu0 0
        %368 = vmatprep.subr.bf16.mxu0 0
        %369 = vmatpush2.bf16.msra.mxu0 0
        %370 = vmatprep.mubr.bf16.mxu0 0
        %371 = vmatmul.mubr.bf16.gmra.mxu0 %v315
        %v372 = vpop.f32.mrf.mxu0
        %v373 = vadd.f32 %v247, %v372
        %v374 = vpop.f32.mrf.mxu0
        %v375 = vpop.f32.mrf.mxu0
        %v376 = vadd.f32 %v247, %v375
        %v377 = vpop.f32.mrf.mxu0
        %378 = vmatprep.mubr.bf16.mxu0 0
        %379 = vmatmul.mubr.bf16.gmra.mxu0 %v318
        %v380 = vpop.f32.mrf.mxu0
        %v381 = vadd.f32 %v247, %v380
        %v382 = vpop.f32.mrf.mxu0
        %v383 = vpop.f32.mrf.mxu0
        %v384 = vadd.f32 %v247, %v383
        %v385 = vpop.f32.mrf.mxu0
        %386 = vmatprep.mubr.bf16.mxu0 0
        %387 = vmatmul.mubr.bf16.gmra.mxu0 %v321
        %v388 = vpop.f32.mrf.mxu0
        %v389 = vadd.f32 %v247, %v388
        %v390 = vpop.f32.mrf.mxu0
        %v391 = vpop.f32.mrf.mxu0
        %v392 = vadd.f32 %v247, %v391
        %v393 = vpop.f32.mrf.mxu0
        %394 = vmatprep.mubr.bf16.mxu0 0
        %395 = vmatmul.mubr.bf16.gmra.mxu0 %v324
        %v396 = vpop.f32.mrf.mxu0
        %v397 = vadd.f32 %v247, %v396
        %v398 = vpop.f32.mrf.mxu0
        %v399 = vpop.f32.mrf.mxu0
        %v400 = vadd.f32 %v247, %v399
        %v401 = vpop.f32.mrf.mxu0
        %402 = vmatprep.mubr.bf16.mxu0 0
        %403 = vmatmul.mubr.bf16.gmra.mxu0 %v327
        %v404 = vpop.f32.mrf.mxu0
        %v405 = vadd.f32 %v247, %v404
        %v406 = vpop.f32.mrf.mxu0
        %v407 = vpop.f32.mrf.mxu0
        %v408 = vadd.f32 %v247, %v407
        %v409 = vpop.f32.mrf.mxu0
        %410 = vmatprep.mubr.bf16.mxu0 0
        %411 = vmatmul.mubr.bf16.gmra.mxu0 %v330
        %v412 = vpop.f32.mrf.mxu0
        %v413 = vadd.f32 %v247, %v412
        %v414 = vpop.f32.mrf.mxu0
        %v415 = vpop.f32.mrf.mxu0
        %v416 = vadd.f32 %v247, %v415
        %v417 = vpop.f32.mrf.mxu0
        %418 = vmatprep.mubr.bf16.mxu0 0
        %419 = vmatmul.mubr.bf16.gmra.mxu0 %v333
        %v420 = vpop.f32.mrf.mxu0
        %v421 = vadd.f32 %v247, %v420
        %v422 = vpop.f32.mrf.mxu0
        %v423 = vpop.f32.mrf.mxu0
        %v424 = vadd.f32 %v247, %v423
        %v425 = vpop.f32.mrf.mxu0
        %426 = vmatprep.mubr.bf16.mxu0 0
        %427 = vmatmul.mubr.bf16.gmra.mxu0 %v336
        %v428 = vpop.f32.mrf.mxu0
        %v429 = vadd.f32 %v247, %v428
        %v430 = vpop.f32.mrf.mxu0
        %v431 = vpop.f32.mrf.mxu0
        %v432 = vadd.f32 %v247, %v431
        %v433 = vpop.f32.mrf.mxu0
        %434 = vdwg.mxu0
        %435 = vst [vmem:[%s202] sm:$0xff] %v373
        %436 = vst [vmem:[%s202 + $0x8] sm:$0xff] %v376
        %437 = vst [vmem:[%s202 + $0x10] sm:$0xff] %v381
        %438 = vst [vmem:[%s202 + $0x18] sm:$0xff] %v384
        %439 = vst [vmem:[%s202 + $0x20] sm:$0xff] %v389
        %440 = vst [vmem:[%s202 + $0x28] sm:$0xff] %v392
        %441 = vst [vmem:[%s202 + $0x30] sm:$0xff] %v397
        %442 = vst [vmem:[%s202 + $0x38] sm:$0xff] %v400
        %443 = vst [vmem:[%s202 + $0x40] sm:$0xff] %v405
        %444 = vst [vmem:[%s202 + $0x48] sm:$0xff] %v408
        %445 = vst [vmem:[%s202 + $0x50] sm:$0xff] %v413
        %446 = vst [vmem:[%s202 + $0x58] sm:$0xff] %v416
        %447 = vst [vmem:[%s202 + $0x60] sm:$0xff] %v421
        %448 = vst [vmem:[%s202 + $0x68] sm:$0xff] %v424
        %449 = vst [vmem:[%s202 + $0x70] sm:$0xff] %v429
        %450 = vst [vmem:[%s202 + $0x78] sm:$0xff] %v432
        %s451 = sand.u32 %s117, 1
        %s452 = scalar_lea.sflag [#allocation3], %s451
        %s453 = sand.u32 %s117, 1
        %s454 = smul.addr %s453, 128
        %s455 = scalar_lea.vmem [#allocation2], %s454
        // Predicated region
        $region33: #{tpu_custom_call.1} parent=31 // pred_check
          %p456 = pneg %p127
        $region34: #{tpu_custom_call.1} parent=31 // pred_check_branch
          %458 = sbr.rel (%p456) target = $region36
        $region35: #{tpu_custom_call.1} parent=31 // pred_region
          %s459 = smul.u32 16, %s21
          %s461 = ssub.s32 2048, 2048
          %462 = vsyncadd %s452, %s461
          %s463 = sadd.s32 %s22, %s459
          %s464 = smul.addr %s463, 128
          %s465 = scalar_lea.hbm %s3, %s464
          %s466 = sshll.u32 %s455, 4
          %s467 = int_to_ptr.vmem [resolvable:$true] %s466
          %472 = dma.vmem_to_hbm [thread:$0]  %s467, 2048, %s465, %s452, 128, 128, 8
        $region36: #{tpu_custom_call.1} parent=31 // pred_fallthru
          _
      $region32: #{tpu_custom_call.1} parent=5 // pred_fallthru
        _
      %p473 = scmp.le.s32.totalorder 2, %s12
      // Predicated region
      $region37: #{tpu_custom_call.1} parent=5 // pred_check
        %p474 = pneg %p473
      $region38: #{tpu_custom_call.1} parent=5 // pred_check_branch
        %476 = sbr.rel (%p474) target = $region40
      $region39: #{tpu_custom_call.1} parent=5 // pred_region
        %s477 = ssub.s32 %s12, 2
        // Predicated region
        $region41: #{tpu_custom_call.1} parent=39 // pred_check
          %p478 = pneg %p133
        $region42: #{tpu_custom_call.1} parent=39 // pred_check_branch
          %480 = sbr.rel (%p478) target = $region44
        $region43: #{tpu_custom_call.1} parent=39 // pred_region
          %s481 = sand.u32 %s118, 1
          %s482 = scalar_lea.sflag [#allocation3], %s481
          %s483 = sand.u32 %s118, 1
          %s484 = smul.addr %s483, 128
          %s485 = scalar_lea.vmem [#allocation2], %s484
          %486 = dma.done %s482, 2048
        $region44: #{tpu_custom_call.1} parent=39 // pred_fallthru
          _
      $region40: #{tpu_custom_call.1} parent=5 // pred_fallthru
        _
    $region6: #{tpu_custom_call.1} parent=1 // loop_footer
      %s16 = sadd.s32 1, %s12
    $region7: #{tpu_custom_call.1} parent=1 // loop_footer_branch
      %11 = sbr.rel target = $region3
    $region8: #{tpu_custom_call.1} parent=1 // loop_exit
      _
    %487 = vsyncpa [#allocation3], 1
    %s488 = scalar_lea.sflag [#allocation3], 1
    %489 = vsyncpa %s488, 1

</llo_original>
